<compile_context>
chip_gen: v6e
topology: v6e:2x2x1
jax: 0.10.0
libtpu: 0.0.40
codegen_flags: <defaults>
</compile_context>

<pallas_src>
import jax
import jax.numpy as jnp
from jax import lax
from jax.experimental import pallas as pl
from jax.experimental.pallas import tpu as pltpu

HIDDEN = 100       # linear1 out_features (PyTorch spec)
HIDDEN_PAD = 128   # padded to one full lane width
OUT = 1            # linear2 out_features


def mlp_kernel(x_ref, w1_ref, b1_ref, w2_ref, b2_ref, o_ref):
    # Layer 1 on the MXU: (tb, D) @ (D, 128) -> (tb, 128), f32 accumulation.
    h = jnp.dot(x_ref[...], w1_ref[...], preferred_element_type=jnp.float32)
    h = jnp.maximum(h + b1_ref[...], 0.0)              # bias + ReLU (VPU)
    # Layer 2: contract the lane axis of h against the (1, 128) w2 row.  This is
    # the flash-attn q@k^T pattern (contracting dims (1,1)); Mosaic lowers it as
    # a transpose_rhs MXU matmul, so there is no XLU transpose of the big h tile
    # and the result lands directly in lane-major (1, tb) layout.
    y = lax.dot_general(
        w2_ref[...], h, (((1,), (1,)), ((), ())),
        preferred_element_type=jnp.float32)
    y = y + b2_ref[0, 0]                               # scalar bias from SMEM
    o_ref[...] = jax.nn.sigmoid(y).astype(o_ref.dtype)


def pad_params(w1, b1, w2, b2):
    """One-time parameter prep (hoisted out of the per-call path).

    w1: (D, 100) already (in, out); b1: (1, 100); w2: (100, 1); b2: (1, 1).
    Returns zero-padded (D,128)/(1,128)/(1,128) weights + (1,1) scalar bias.
    Padding is numerically exact: padded hidden columns stay 0 through
    bias+ReLU and multiply zero entries of the w2 row.
    """
    D, H = w1.shape
    assert H <= HIDDEN_PAD
    w1p = jnp.zeros((D, HIDDEN_PAD), jnp.float32).at[:, :H].set(w1)
    b1p = jnp.zeros((1, HIDDEN_PAD), jnp.float32).at[:, :H].set(
        jnp.asarray(b1, jnp.float32).reshape(1, H))
    w2row = jnp.zeros((1, HIDDEN_PAD), jnp.float32).at[:, :H].set(
        jnp.asarray(w2, jnp.float32).reshape(1, H))
    b2s = jnp.asarray(b2, jnp.float32).reshape(1, 1)
    return w1p, b1p, w2row, b2s


def _pick_tb(B, D):
    """Batch-tile heuristic: biggest tile that fits a conservative VMEM budget.

    v5e/v6e (1 TC): one grid step whenever possible (every extra step is pure
    ~0.35us overhead).  v7x (2 TCs): ensure >=2 steps on the 'parallel' axis for
    large batches so both cores / both halves of HBM bandwidth are used.
    """
    try:
        kind = str(jax.devices()[0].device_kind).lower()
    except Exception:  # pragma: no cover - defensive
        kind = ""
    budget = 24 << 20                                    # VMEM budget for tiles
    per_row = (2 * D + HIDDEN_PAD + 2) * 4               # 2x x-buf + h + out row
    cap = min(8192, budget // per_row)
    cap = max(8, (cap // 8) * 8)

    if B <= cap:
        tb = B
    else:
        tb = 0
        for t in range(8, cap + 1, 8):                    # largest divisor of B
            if B % t == 0:
                tb = t
        if tb == 0:
            tb = B                                         # fallback: one step

    # v7x megacore: give the parallel axis at least 2 steps for big batches.
    if "v7" in kind and B >= 1024 and B // tb < 2:
        half = B // 2
        if B % 2 == 0 and half % 8 == 0:
            tb = half
    return tb


def mlp_forward(x, w1p, b1p, w2row, b2s, *, tb=None):
    """x: (B, D) f32; w1p/b1p/w2row/b2s: outputs of pad_params()."""
    B, D = x.shape
    if tb is None:
        tb = _pick_tb(B, D)
    assert B % tb == 0 and (tb == B or tb % 8 == 0), "batch must tile evenly"
    grid_b = B // tb

    weight_bytes = (D * HIDDEN_PAD + 2 * HIDDEN_PAD + 1) * 4
    cost = pl.CostEstimate(
        flops=2 * B * D * HIDDEN_PAD + 2 * B * HIDDEN_PAD,
        transcendentals=B,                                 # sigmoid exp per row
        bytes_accessed=B * D * 4 + B * 4 + weight_bytes,
    )

    out = pl.pallas_call(
        mlp_kernel,
        # Lane-dense output slab: one (1, tb) full-lane row per grid step.
        out_shape=jax.ShapeDtypeStruct((grid_b, tb), jnp.float32),
        grid_spec=pltpu.PrefetchScalarGridSpec(
            num_scalar_prefetch=0,
            grid=(grid_b,),
            in_specs=[
                pl.BlockSpec((tb, D), lambda i: (i, 0)),
                # Constant block index -> weights stay VMEM-resident, no re-DMA.
                pl.BlockSpec((D, HIDDEN_PAD), lambda i: (0, 0)),
                pl.BlockSpec((1, HIDDEN_PAD), lambda i: (0, 0)),
                pl.BlockSpec((1, HIDDEN_PAD), lambda i: (0, 0)),
                pl.BlockSpec(memory_space=pltpu.MemorySpace.SMEM),  # scalar b2
            ],
            out_specs=pl.BlockSpec((1, tb), lambda i: (i, 0)),
        ),
        compiler_params=pltpu.CompilerParams(
            dimension_semantics=("parallel",),
            vmem_limit_bytes=48 << 20,   # above 16/32 MiB defaults, below v7x physical
        ),
        cost_estimate=cost,
    )(x, w1p, b1p, w2row, b2s)

    # (grid_b, tb) row-major is already batch order; restore the module's (B, 1).
    return out.reshape(B, OUT)


def init_params(key, in_var):
    """Deterministic init mimicking PyTorch nn.Linear (uniform +/- 1/sqrt(fan_in))."""
    k1, k2, k3, k4 = jax.random.split(key, 4)
    lim1 = 1.0 / jnp.sqrt(jnp.float32(in_var))
    lim2 = 1.0 / jnp.sqrt(jnp.float32(HIDDEN))
    # stored already transposed: (in, out)
    w1 = jax.random.uniform(k1, (in_var, HIDDEN), jnp.float32, -lim1, lim1)
    b1 = jax.random.uniform(k2, (1, HIDDEN), jnp.float32, -lim1, lim1)
    w2 = jax.random.uniform(k3, (HIDDEN, OUT), jnp.float32, -lim2, lim2)
    b2 = jax.random.uniform(k4, (1, OUT), jnp.float32, -lim2, lim2)
    return w1, b1, w2, b2


def reference_forward(x, w1, b1, w2, b2):
    h = jnp.maximum(x @ w1 + b1, 0.0)
    return jax.nn.sigmoid(h @ w2 + b2)


if __name__ == "__main__":
    key = jax.random.PRNGKey(0)
    k_x, k_p, k_x2, k_x3 = jax.random.split(key, 4)

    in_var = 32
    w1, b1, w2, b2 = init_params(k_p, in_var)
    # One-time padded/packed params (hoisted out of the forward path).
    padded = pad_params(w1, b1, w2, b2)

    # Small (module-sized) case: single grid step, whole batch in one block.
    x_small = jax.random.normal(k_x, (16, in_var), jnp.float32)
    out_small = jax.block_until_ready(mlp_forward(x_small, *padded))
    ref_small = reference_forward(x_small, w1, b1, w2, b2)
    assert out_small.shape == (16, 1)
    assert jnp.allclose(out_small, ref_small, atol=1e-5, rtol=1e-5)

    # Medium batch with the auto tile picker (1 step on v5e/v6e, 2 on v7x).
    x_med = jax.random.normal(k_x2, (1024, in_var), jnp.float32)
    out_med = jax.block_until_ready(mlp_forward(x_med, *padded))
    ref_med = reference_forward(x_med, w1, b1, w2, b2)
    assert out_med.shape == (1024, 1)
    assert jnp.allclose(out_med, ref_med, atol=1e-5, rtol=1e-5)

    # Explicit multi-grid-step path (forced small tile) to validate tiling.
    x_big = jax.random.normal(k_x3, (2048, in_var), jnp.float32)
    out_big = jax.block_until_ready(mlp_forward(x_big, *padded, tb=256))
    ref_big = reference_forward(x_big, w1, b1, w2, b2)
    assert out_big.shape == (2048, 1)
    assert jnp.allclose(out_big, ref_big, atol=1e-5, rtol=1e-5)

    # TODO(synk): eval_cf / evalmodified are host-side metric loops over model
    # outputs; they are not kernels and are intentionally not implemented here.
    print("KERNEL_OK")
</pallas_src>

<mosaic_0001>
module attributes {stable_mosaic.version = 11 : i64} {
  func.func @mlp_kernel(%arg0: i32, %arg1: memref<16x32xf32, #tpu.memory_space<vmem>>, %arg2: memref<32x128xf32, #tpu.memory_space<vmem>>, %arg3: memref<1x128xf32, #tpu.memory_space<vmem>>, %arg4: memref<1x128xf32, #tpu.memory_space<vmem>>, %arg5: memref<1x1xf32, #tpu.memory_space<smem>>, %arg6: memref<1x16xf32, #tpu.memory_space<vmem>>) attributes {dimension_semantics = [#tpu.dimension_semantics<parallel>], iteration_bounds = array<i64: 1>, scalar_prefetch = 0 : i64, scratch_operands = 0 : i64, tpu.core_type = #tpu.core_type<tc>, window_params = [{transform_indices = @transform_0, window_bounds = array<i64: 16, 32>}, {pipeline_mode = #tpu.pipeline_mode<synchronous>, transform_indices = @transform_1, window_bounds = array<i64: 32, 128>}, {pipeline_mode = #tpu.pipeline_mode<synchronous>, transform_indices = @transform_2, window_bounds = array<i64: 1, 128>}, {pipeline_mode = #tpu.pipeline_mode<synchronous>, transform_indices = @transform_3, window_bounds = array<i64: 1, 128>}, {transform_indices = @transform_4, window_bounds = array<i64: 1, 1>}, {transform_indices = @transform_5, window_bounds = array<i64: 1, 16>}]} {
    %c0 = arith.constant 0 : index
    %c0_0 = arith.constant 0 : index
    %0 = vector.load %arg1[%c0, %c0_0] : memref<16x32xf32, #tpu.memory_space<vmem>>, vector<16x32xf32>
    %c0_1 = arith.constant 0 : index
    %c0_2 = arith.constant 0 : index
    %1 = vector.load %arg2[%c0_1, %c0_2] : memref<32x128xf32, #tpu.memory_space<vmem>>, vector<32x128xf32>
    %cst = arith.constant dense<0.000000e+00> : vector<16x128xf32>
    %2 = tpu.matmul %0, %1, %cst {dimension_numbers = #tpu.dot_dimension_numbers<[1], [0], [0], [1], [0, 0, 1, 1], [], []>} : vector<16x32xf32>, vector<32x128xf32>, vector<16x128xf32> -> vector<16x128xf32>
    %c0_3 = arith.constant 0 : index
    %c0_4 = arith.constant 0 : index
    %3 = vector.load %arg3[%c0_3, %c0_4] : memref<1x128xf32, #tpu.memory_space<vmem>>, vector<1x128xf32>
    %4 = vector.broadcast %3 : vector<1x128xf32> to vector<16x128xf32>
    %5 = arith.addf %2, %4 : vector<16x128xf32>
    %cst_5 = arith.constant 0.000000e+00 : f32
    %6 = vector.broadcast %cst_5 : f32 to vector<16x128xf32>
    %7 = arith.maximumf %5, %6 : vector<16x128xf32>
    %c0_6 = arith.constant 0 : index
    %c0_7 = arith.constant 0 : index
    %8 = vector.load %arg4[%c0_6, %c0_7] : memref<1x128xf32, #tpu.memory_space<vmem>>, vector<1x128xf32>
    %cst_8 = arith.constant dense<0.000000e+00> : vector<1x16xf32>
    %9 = tpu.matmul %8, %7, %cst_8 {dimension_numbers = #tpu.dot_dimension_numbers<[1], [1], [0], [0], [0, 0, 1, 0], [], []>} : vector<1x128xf32>, vector<16x128xf32>, vector<1x16xf32> -> vector<1x16xf32>
    %c0_9 = arith.constant 0 : index
    %c0_10 = arith.constant 0 : index
    %10 = memref.load %arg5[%c0_9, %c0_10] : memref<1x1xf32, #tpu.memory_space<smem>>
    %11 = vector.broadcast %10 : f32 to vector<1x16xf32>
    %12 = arith.addf %9, %11 : vector<1x16xf32>
    %13 = arith.negf %12 : vector<1x16xf32>
    %14 = math.exp %13 : vector<1x16xf32>
    %cst_11 = arith.constant 1.000000e+00 : f32
    %15 = vector.broadcast %cst_11 : f32 to vector<1x16xf32>
    %16 = arith.addf %15, %14 : vector<1x16xf32>
    %17 = arith.divf %15, %16 : vector<1x16xf32>
    %c0_12 = arith.constant 0 : index
    %c0_13 = arith.constant 0 : index
    %18 = vector.load %arg6[%c0_12, %c0_13] : memref<1x16xf32, #tpu.memory_space<vmem>>, vector<1x16xf32>
    tpu.vector_store %arg6[%c0_12, %c0_13], %17 {strides = array<i32>} : memref<1x16xf32, #tpu.memory_space<vmem>>, vector<1x16xf32>,
    return
  }
  func.func @transform_0(%arg0: i32) -> (i32, i32) {
    %c0_i32 = arith.constant 0 : i32
    %c0_i32_0 = arith.constant 0 : i32
    return %arg0, %c0_i32 : i32, i32
  }
  func.func @transform_1(%arg0: i32) -> (i32, i32) {
    %c0_i32 = arith.constant 0 : i32
    %c0_i32_0 = arith.constant 0 : i32
    %c0_i32_1 = arith.constant 0 : i32
    return %c0_i32, %c0_i32_0 : i32, i32
  }
  func.func @transform_2(%arg0: i32) -> (i32, i32) {
    %c0_i32 = arith.constant 0 : i32
    %c0_i32_0 = arith.constant 0 : i32
    %c0_i32_1 = arith.constant 0 : i32
    return %c0_i32, %c0_i32_0 : i32, i32
  }
  func.func @transform_3(%arg0: i32) -> (i32, i32) {
    %c0_i32 = arith.constant 0 : i32
    %c0_i32_0 = arith.constant 0 : i32
    %c0_i32_1 = arith.constant 0 : i32
    return %c0_i32, %c0_i32_0 : i32, i32
  }
  func.func @transform_4(%arg0: i32) -> (i32, i32) {
    %c0_i32 = arith.constant 0 : i32
    %c0_i32_0 = arith.constant 0 : i32
    %c0_i32_1 = arith.constant 0 : i32
    return %c0_i32, %c0_i32_0 : i32, i32
  }
  func.func @transform_5(%arg0: i32) -> (i32, i32) {
    %c0_i32 = arith.constant 0 : i32
    %c0_i32_0 = arith.constant 0 : i32
    return %arg0, %c0_i32 : i32, i32
  }
}

</mosaic_0001>

<llo_original>
// kernel: tpu_custom_call.1
$region0: #{tpu_custom_call.1}
  #allocation0 [shape = 'u32[]', space=smem, size = 0x4, offset = 0x4, fixed_abs, tag = 'smem constant byte address 0x4 - core index']
  #allocation1 [shape = 'u32[144,128]{1,0:T(1,128)}', space=vmem, size = 0x12000, scoped, tag = 'internal scratch']
  #allocation2 [shape = 'f32[1,1]{1,0:T(1,128)S(6)}', space=smem, size = 0x200, scoped, tag = 'scoped memory for tpu_custom_call.1']
  %s0 = inlined_call_operand.hbm [shape: f32[16,32], index: 0, kind: input, shape index: {}]
  %s1 = inlined_call_operand.hbm [shape: f32[32,128], index: 1, kind: input, shape index: {}]
  %s2 = inlined_call_operand.vmem [shape: f32[1,128], index: 2, kind: input, shape index: {}]
  %s3 = inlined_call_operand.vmem [shape: f32[1,128], index: 3, kind: input, shape index: {}]
  %s4 = inlined_call_operand.<no memory space> [shape: f32[1,1], index: 4, kind: input, shape index: {}]
  %s5 = inlined_call_operand.hbm [shape: f32[1,16], index: 5, kind: output, shape index: {}]
  %s6 = sld [smem:[#allocation0]]
  $region38: #{tpu_custom_call.1} parent=0
    _
  %s8 = ssub.s32 1, %s6
  %s9 = scalar_select 0, %s8, %s6
  %10 = sst [smem:[#allocation2]] %s4
  $region1: #{tpu_custom_call.1} parent=0
    #allocation3 [shape = 'u8[8192]{0}', space=vmem, size = 0x2000, scoped, tag = 'input window, operand 0, single buffered']
    #allocation4 [shape = 's32[1]{0}', space=sflag, size = 0x4, scoped, tag = 'scoped memory for tpu_custom_call.1']
    #allocation5 [shape = 's32[1]{0}', space=sflag, size = 0x4, scoped, tag = 'scoped memory for tpu_custom_call.1']
    #allocation6 [shape = 'u8[16384]{0}', space=vmem, size = 0x4000, scoped, tag = 'input window, operand 1, single buffered']
    #allocation7 [shape = 's32[1]{0}', space=sflag, size = 0x4, scoped, tag = 'scoped memory for tpu_custom_call.1']
    #allocation8 [shape = 'u8[512]{0}', space=vmem, size = 0x400, scoped, tag = 'output window, operand 0, single buffered']
    %11 = vsyncpa [#allocation4], 0
    %12 = vsyncpa [#allocation7], 0
    %13 = vsyncpa [#allocation5], 0
    // Predicated region
    $region2: #{tpu_custom_call.1} parent=1 // pred_check
      _
    $region3: #{tpu_custom_call.1} parent=1 // pred_check_branch
      %15 = sbr.rel (0) target = $region5
    $region4: #{tpu_custom_call.1} parent=1 // pred_region
      %s17 = ssub.s32 256, 256
      %18 = vsyncadd [#allocation4], %s17
      %s19 = sshll.u32 [#allocation3], 4
      %s20 = int_to_ptr.vmem [resolvable:$true] %s19
      %25 = dma.hbm_to_vmem [thread:$0]  %s0, 256, %s20, [#allocation4], 128, 128, 8
    $region5: #{tpu_custom_call.1} parent=1 // pred_fallthru
      _
    // Predicated region
    $region6: #{tpu_custom_call.1} parent=1 // pred_check
      _
    $region7: #{tpu_custom_call.1} parent=1 // pred_check_branch
      %27 = sbr.rel (0) target = $region9
    $region8: #{tpu_custom_call.1} parent=1 // pred_region
      %s29 = ssub.s32 512, 512
      %30 = vsyncadd [#allocation7], %s29
      %s31 = sshll.u32 [#allocation6], 4
      %s32 = int_to_ptr.vmem [resolvable:$true] %s31
      %37 = dma.hbm_to_vmem [thread:$0]  %s1, 512, %s32, [#allocation7], 128, 128, 8
    $region9: #{tpu_custom_call.1} parent=1 // pred_fallthru
      _
    // Predicated region
    $region10: #{tpu_custom_call.1} parent=1 // pred_check
      _
    $region11: #{tpu_custom_call.1} parent=1 // pred_check_branch
      %39 = sbr.rel (0) target = $region13
    $region12: #{tpu_custom_call.1} parent=1 // pred_region
      _
    $region13: #{tpu_custom_call.1} parent=1 // pred_fallthru
      _
    // Predicated region
    $region14: #{tpu_custom_call.1} parent=1 // pred_check
      _
    $region15: #{tpu_custom_call.1} parent=1 // pred_check_branch
      %41 = sbr.rel (0) target = $region17
    $region16: #{tpu_custom_call.1} parent=1 // pred_region
      _
    $region17: #{tpu_custom_call.1} parent=1 // pred_fallthru
      _
    // Predicated region
    $region18: #{tpu_custom_call.1} parent=1 // pred_check
      _
    $region19: #{tpu_custom_call.1} parent=1 // pred_check_branch
      %43 = sbr.rel (0) target = $region21
    $region20: #{tpu_custom_call.1} parent=1 // pred_region
      _
    $region21: #{tpu_custom_call.1} parent=1 // pred_fallthru
      _
    // Predicated region
    $region22: #{tpu_custom_call.1} parent=1 // pred_check
      _
    $region23: #{tpu_custom_call.1} parent=1 // pred_check_branch
      %45 = sbr.rel (0) target = $region25
    $region24: #{tpu_custom_call.1} parent=1 // pred_region
      %46 = dma.done [#allocation4], 256
    $region25: #{tpu_custom_call.1} parent=1 // pred_fallthru
      _
    // Predicated region
    $region26: #{tpu_custom_call.1} parent=1 // pred_check
      _
    $region27: #{tpu_custom_call.1} parent=1 // pred_check_branch
      %48 = sbr.rel (0) target = $region29
    $region28: #{tpu_custom_call.1} parent=1 // pred_region
      %49 = dma.done [#allocation7], 512
    $region29: #{tpu_custom_call.1} parent=1 // pred_fallthru
      _
    %v50 = vld [vmem:[#allocation3] sm:$0xff]
    %v51 = vld [vmem:[#allocation3 + $0x8] sm:$0xff]
    %v52 = vld [vmem:[#allocation6] sm:$0xff]
    %v53 = vld [vmem:[#allocation6 + $0x8] sm:$0xff]
    %v54 = vld [vmem:[#allocation6 + $0x10] sm:$0xff]
    %v55 = vld [vmem:[#allocation6 + $0x18] sm:$0xff]
    %v56 = vld [vmem:[%s2] sm:$0x1]
    %v58 = vlaneseq
    %v59 = vshrl.u32 %v58, 7
    %v60 = vsub.s32 0, %v59
    %v61 = vrot.slane %v56, %v60
    %vm63 = vcmask 261120
    %v65 = vsel %vm63, %v50, 0
    %v68 = vsel %vm63, %v51, 0
    %70 = vmatprep.subr.mxu0 0.0
    %71 = vmatpush1.msra.mxu0 0.0
    %72 = vmatprep.subr.mxu0 0.0
    %73 = vmatpush1.msra.mxu0 0.0
    %74 = vmatprep.subr.mxu0 0.0
    %75 = vmatpush1.msra.mxu0 0.0
    %76 = vmatprep.subr.mxu0 0.0
    %77 = vmatpush1.msra.mxu0 0.0
    %78 = vmatprep.subr.mxu0 0.0
    %79 = vmatpush1.msra.mxu0 0.0
    %80 = vmatprep.subr.mxu0 0.0
    %81 = vmatpush1.msra.mxu0 0.0
    %82 = vmatprep.subr.mxu0 0.0
    %83 = vmatpush1.msra.mxu0 0.0
    %84 = vmatprep.subr.mxu0 0.0
    %85 = vmatpush1.msra.mxu0 0.0
    %86 = vmatprep.subr.mxu0 0.0
    %87 = vmatpush1.msra.mxu0 0.0
    %88 = vmatprep.subr.mxu0 0.0
    %89 = vmatpush1.msra.mxu0 0.0
    %90 = vmatprep.subr.mxu0 0.0
    %91 = vmatpush1.msra.mxu0 0.0
    %92 = vmatprep.subr.mxu0 0.0
    %93 = vmatpush1.msra.mxu0 0.0
    %94 = vmatprep.subr.mxu0 0.0
    %95 = vmatpush1.msra.mxu0 %v55
    %96 = vmatprep.subr.mxu0 0.0
    %97 = vmatpush1.msra.mxu0 %v54
    %98 = vmatprep.subr.mxu0 0.0
    %99 = vmatpush1.msra.mxu0 %v53
    %100 = vmatprep.subr.mxu0 0.0
    %101 = vmatpush1.msra.mxu0 %v52
    %102 = vmatprep.subr.mxu0 0.0
    %103 = vmatpush2.msra.mxu0 0.0
    %104 = vmatprep.subr.mxu0 0.0
    %105 = vmatpush2.msra.mxu0 0.0
    %106 = vmatprep.subr.mxu0 0.0
    %107 = vmatpush2.msra.mxu0 0.0
    %108 = vmatprep.subr.mxu0 0.0
    %109 = vmatpush2.msra.mxu0 0.0
    %110 = vmatprep.subr.mxu0 0.0
    %111 = vmatpush2.msra.mxu0 0.0
    %112 = vmatprep.subr.mxu0 0.0
    %113 = vmatpush2.msra.mxu0 0.0
    %114 = vmatprep.subr.mxu0 0.0
    %115 = vmatpush2.msra.mxu0 0.0
    %116 = vmatprep.subr.mxu0 0.0
    %117 = vmatpush2.msra.mxu0 0.0
    %118 = vmatprep.subr.mxu0 0.0
    %119 = vmatpush2.msra.mxu0 0.0
    %120 = vmatprep.subr.mxu0 0.0
    %121 = vmatpush2.msra.mxu0 0.0
    %122 = vmatprep.subr.mxu0 0.0
    %123 = vmatpush2.msra.mxu0 0.0
    %124 = vmatprep.subr.mxu0 0.0
    %125 = vmatpush2.msra.mxu0 0.0
    %126 = vmatprep.subr.mxu0 0.0
    %127 = vmatpush2.msra.mxu0 0.0
    %128 = vmatprep.subr.mxu0 0.0
    %129 = vmatpush2.msra.mxu0 0.0
    %130 = vmatprep.subr.mxu0 0.0
    %131 = vmatpush2.msra.mxu0 0.0
    %132 = vmatprep.subr.mxu0 0.0
    %133 = vmatpush2.msra.mxu0 0.0
    %134 = vmatprep.mubr.f32.mxu0 0.0
    %135 = vmatmul.mubr.f32.gmra.mxu0 %v65
    %v136 = vpop.f32.mrf.mxu0
    %v137 = vadd.f32 %v61, %v136
    %v138 = vpop.f32.mrf.mxu0
    %139 = vmatprep.mubr.f32.mxu0 0.0
    %140 = vmatmul.mubr.f32.gmra.mxu0 %v68
    %v141 = vpop.f32.mrf.mxu0
    %v142 = vadd.f32 %v61, %v141
    %v143 = vpop.f32.mrf.mxu0
    %144 = vdwg.mxu0
    %v145 = vmax.f32 %v137, 0.0
    %v146 = vmax.f32 %v142, 0.0
    %v147 = vld [vmem:[%s3] sm:$0x1]
    %s148 = sld [smem:[#allocation2]]
    %v149 = vstv %s148
    %150 = vmatprep.subr.mxu0 0.0
    %151 = vmatpush1.xpose.msra.mxu0 0.0
    %152 = vmatprep.subr.mxu0 0.0
    %153 = vmatpush1.xpose.msra.mxu0 0.0
    %154 = vmatprep.subr.mxu0 0.0
    %155 = vmatpush1.xpose.msra.mxu0 0.0
    %156 = vmatprep.subr.mxu0 0.0
    %157 = vmatpush1.xpose.msra.mxu0 0.0
    %158 = vmatprep.subr.mxu0 0.0
    %159 = vmatpush1.xpose.msra.mxu0 0.0
    %160 = vmatprep.subr.mxu0 0.0
    %161 = vmatpush1.xpose.msra.mxu0 0.0
    %162 = vmatprep.subr.mxu0 0.0
    %163 = vmatpush1.xpose.msra.mxu0 0.0
    %164 = vmatprep.subr.mxu0 0.0
    %165 = vmatpush1.xpose.msra.mxu0 0.0
    %166 = vmatprep.subr.mxu0 0.0
    %167 = vmatpush1.xpose.msra.mxu0 0.0
    %168 = vmatprep.subr.mxu0 0.0
    %169 = vmatpush1.xpose.msra.mxu0 0.0
    %170 = vmatprep.subr.mxu0 0.0
    %171 = vmatpush1.xpose.msra.mxu0 0.0
    %172 = vmatprep.subr.mxu0 0.0
    %173 = vmatpush1.xpose.msra.mxu0 0.0
    %174 = vmatprep.subr.mxu0 0.0
    %175 = vmatpush1.xpose.msra.mxu0 0.0
    %176 = vmatprep.subr.mxu0 0.0
    %177 = vmatpush1.xpose.msra.mxu0 0.0
    %178 = vmatprep.subr.mxu0 0.0
    %179 = vmatpush1.xpose.msra.mxu0 %v146
    %180 = vmatprep.subr.mxu0 0.0
    %181 = vmatpush1.xpose.msra.mxu0 %v145
    %182 = vmatprep.subr.mxu0 0.0
    %183 = vmatpush2.xpose.msra.mxu0 0.0
    %184 = vmatprep.subr.mxu0 0.0
    %185 = vmatpush2.xpose.msra.mxu0 0.0
    %186 = vmatprep.subr.mxu0 0.0
    %187 = vmatpush2.xpose.msra.mxu0 0.0
    %188 = vmatprep.subr.mxu0 0.0
    %189 = vmatpush2.xpose.msra.mxu0 0.0
    %190 = vmatprep.subr.mxu0 0.0
    %191 = vmatpush2.xpose.msra.mxu0 0.0
    %192 = vmatprep.subr.mxu0 0.0
    %193 = vmatpush2.xpose.msra.mxu0 0.0
    %194 = vmatprep.subr.mxu0 0.0
    %195 = vmatpush2.xpose.msra.mxu0 0.0
    %196 = vmatprep.subr.mxu0 0.0
    %197 = vmatpush2.xpose.msra.mxu0 0.0
    %198 = vmatprep.subr.mxu0 0.0
    %199 = vmatpush2.xpose.msra.mxu0 0.0
    %200 = vmatprep.subr.mxu0 0.0
    %201 = vmatpush2.xpose.msra.mxu0 0.0
    %202 = vmatprep.subr.mxu0 0.0
    %203 = vmatpush2.xpose.msra.mxu0 0.0
    %204 = vmatprep.subr.mxu0 0.0
    %205 = vmatpush2.xpose.msra.mxu0 0.0
    %206 = vmatprep.subr.mxu0 0.0
    %207 = vmatpush2.xpose.msra.mxu0 0.0
    %208 = vmatprep.subr.mxu0 0.0
    %209 = vmatpush2.xpose.msra.mxu0 0.0
    %210 = vmatprep.subr.mxu0 0.0
    %211 = vmatpush2.xpose.msra.mxu0 0.0
    %212 = vmatprep.subr.mxu0 0.0
    %213 = vmatpush2.xpose.msra.mxu0 0.0
    %214 = vmatprep.mubr.f32.mxu0 0.0
    %215 = vmatmul.mubr.f32.gmra.mxu0 %v147
    %v216 = vpop.f32.mrf.mxu0
    %v217 = vadd.f32 %v149, %v216
    %v218 = vpop.f32.mrf.mxu0
    %219 = vdwg.mxu0
    %v220 = vxor.u32 %v217, 2147483648
    %v221 = vmul.f32 %v220, 1.442695
    %v222 = vpow.pop %v221
    %v223 = vadd.f32 %v222, 1.0
    %v224 = vrcp.pop %v223
    %v225 = vmul.f32 1.0, %v224
    %vm226 = vcmask 122880
    %227 = vst.msk [vmem:[#allocation8] sm:$0x1] %vm226, %v225
    // Predicated region
    $region30: #{tpu_custom_call.1} parent=1 // pred_check
      _
    $region31: #{tpu_custom_call.1} parent=1 // pred_check_branch
      %229 = sbr.rel (0) target = $region33
    $region32: #{tpu_custom_call.1} parent=1 // pred_region
      %s231 = ssub.s32 16, 16
      %232 = vsyncadd [#allocation5], %s231
      %s234 = sshll.u32 [#allocation8], 4
      %s235 = int_to_ptr.vmem [resolvable:$true] %s234
      %237 = dma.vmem_to_hbm [thread:$0]  %s235, 16, %s5, [#allocation5]
    $region33: #{tpu_custom_call.1} parent=1 // pred_fallthru
      _
    // Predicated region
    $region34: #{tpu_custom_call.1} parent=1 // pred_check
      _
    $region35: #{tpu_custom_call.1} parent=1 // pred_check_branch
      %239 = sbr.rel (0) target = $region37
    $region36: #{tpu_custom_call.1} parent=1 // pred_region
      %240 = dma.done [#allocation5], 16
    $region37: #{tpu_custom_call.1} parent=1 // pred_fallthru
      _
    %241 = vsyncpa [#allocation4], 1
    %242 = vsyncpa [#allocation7], 1
    %243 = vsyncpa [#allocation5], 1

</llo_original>
